<compile_context>
chip_gen: v7x
topology: tpu7x:2x2x1
jax: 0.10.0
libtpu: 0.0.40
codegen_flags: <defaults>
</compile_context>

<pallas_src>
import jax
import jax.numpy as jnp
from jax.experimental import pallas as pl
from jax.experimental.pallas import tpu as pltpu

_LANES = 128
_SUBLANES = 8
_ALIGN = _SUBLANES * _LANES           # 1024 elements: one f32 vreg worth of data
_TARGET_TILE_BYTES = 8 * 1024 * 1024  # ~8 MiB per pipelined input tile
_ACC_ROWS_WIDE = 64                   # 8 independent accumulation chains


def _make_kernel(tile_rows, tiles_per_part, num_tiles, acc_rows,
                 valid_last_rows, guard_full):
    """guard_full: True when the 2-way split has a clamped duplicate tile."""
    needs_mask = valid_last_rows != tile_rows
    full_limit = num_tiles - 1 if needs_mask else num_tiles

    def _accumulate(acc_ref, xt):
        # lane-dense partial sums; cross-lane collapse happens once in wrapper
        acc_ref[...] += xt.reshape(-1, acc_rows, _LANES).sum(axis=0)

    def kernel(x_ref, acc_ref):
        p = pl.program_id(0)
        i = pl.program_id(1)
        tile_idx = p * tiles_per_part + i

        @pl.when(i == 0)
        def _():
            acc_ref[...] = jnp.zeros_like(acc_ref)

        if not (needs_mask or guard_full):
            # fast path: every tile is full and in range; no mask, no guard
            _accumulate(acc_ref, x_ref[...].astype(jnp.float32))
        else:
            # full, in-range tiles: plain accumulate (no iota/select cost)
            @pl.when(tile_idx < full_limit)
            def _():
                _accumulate(acc_ref, x_ref[...].astype(jnp.float32))

            if needs_mask:
                # only the single ragged last tile pays for the row mask;
                # the mask is applied immediately after the load so garbage
                # rows never feed arithmetic.
                @pl.when(tile_idx == num_tiles - 1)
                def _():
                    xt = x_ref[...].astype(jnp.float32)
                    row_ids = jax.lax.broadcasted_iota(
                        jnp.int32, (tile_rows, _LANES), 0)
                    _accumulate(acc_ref,
                                jnp.where(row_ids < valid_last_rows, xt, 0.0))
            # tiles with tile_idx >= num_tiles (clamped duplicates from the
            # odd-count 2-way split) are skipped entirely.

    return kernel


def show_layer_output_statics2(x, *, tile_rows=None):
    """Mirrors ShowLayerOutputStatics2.forward: returns (x, mean(x)).

    x is returned zero-copy from the wrapper; the kernel only reads x and
    emits per-partition (acc_rows,128) f32 partial sums.
    """
    total = x.size
    flat = x.reshape(-1)

    # Split into a 1024-aligned prefix (kernel) and a tiny tail (<1024 elems,
    # plain XLA sum) instead of materializing a padded copy of the array.
    aligned = (total // _ALIGN) * _ALIGN
    tail_sum = jnp.float32(0.0)
    if aligned < total:
        tail_sum = jnp.sum(flat[aligned:].astype(jnp.float32))

    if aligned == 0:
        # degenerate tiny input: not even one (8,128) slab for the kernel
        return x, tail_sum / jnp.float32(total)

    rows = aligned // _LANES              # always a multiple of 8
    x2d = flat[:aligned].reshape(rows, _LANES)

    # --- tile sizing: ~8 MiB per step regardless of dtype; rows a multiple
    # of 64 so the wide accumulator reshape is layout-preserving.
    itemsize = jnp.dtype(x.dtype).itemsize
    if tile_rows is None:
        tile_rows = _TARGET_TILE_BYTES // (_LANES * itemsize)
        tile_rows = max(_ACC_ROWS_WIDE,
                        (tile_rows // _ACC_ROWS_WIDE) * _ACC_ROWS_WIDE)
    else:
        tile_rows = max(_SUBLANES, (tile_rows // _SUBLANES) * _SUBLANES)
    if tile_rows >= rows:
        tile_rows = rows                  # full-dim block for small inputs
    acc_rows = _ACC_ROWS_WIDE if tile_rows % _ACC_ROWS_WIDE == 0 else _SUBLANES

    num_tiles = pl.cdiv(rows, tile_rows)
    valid_last_rows = rows - (num_tiles - 1) * tile_rows

    # --- 2 "parallel" partitions whenever there is more than one tile so
    # both v7x TensorCores stay busy even for odd tile counts.
    n_parts = 2 if num_tiles >= 2 else 1
    tiles_per_part = pl.cdiv(num_tiles, n_parts)
    has_oob_tile = n_parts * tiles_per_part > num_tiles

    tpp, last = tiles_per_part, num_tiles - 1
    if has_oob_tile:
        in_index = lambda p, i: (jnp.minimum(p * tpp + i, last), 0)
    else:
        in_index = lambda p, i: (p * tpp + i, 0)

    partials = pl.pallas_call(
        _make_kernel(tile_rows, tiles_per_part, num_tiles, acc_rows,
                     valid_last_rows, has_oob_tile),
        out_shape=jax.ShapeDtypeStruct((n_parts, acc_rows, _LANES), jnp.float32),
        grid=(n_parts, tiles_per_part),
        in_specs=[pl.BlockSpec((tile_rows, _LANES), in_index)],
        out_specs=pl.BlockSpec((None, acc_rows, _LANES), lambda p, i: (p, 0, 0)),
        compiler_params=pltpu.CompilerParams(
            dimension_semantics=("parallel", "arbitrary"),
            vmem_limit_bytes=32 * 1024 * 1024),
    )(x2d)

    # final cross-lane/sublane collapse happens exactly once, on a tiny array
    mean = (jnp.sum(partials) + tail_sum) / jnp.float32(total)
    return x, mean


if __name__ == "__main__":
    # TODO(synk): the original module's file-logging side effect (os.makedirs /
    # open().write of the mean) is host I/O with no Pallas equivalent; only the
    # mean computation + identity return are implemented.
    key = jax.random.PRNGKey(0)

    # case 1: the canonical small NCHW activation implied by the module
    x1 = jax.random.normal(key, (2, 4, 16, 16), dtype=jnp.float32)
    y1, m1 = show_layer_output_statics2(x1)
    y1 = jax.block_until_ready(y1)
    m1 = jax.block_until_ready(m1)
    assert y1.shape == x1.shape and y1.dtype == x1.dtype
    assert jnp.allclose(y1, x1), "identity pass-through mismatch"
    ref1 = jnp.mean(x1.astype(jnp.float32))
    assert jnp.allclose(m1, ref1, atol=1e-5, rtol=1e-5), (m1, ref1)

    # case 2: awkward element count -> aligned prefix via kernel + XLA tail sum
    x2 = jax.random.normal(jax.random.PRNGKey(1), (3, 17, 29), dtype=jnp.float32)
    _, m2 = show_layer_output_statics2(x2)
    m2 = jax.block_until_ready(m2)
    ref2 = jnp.mean(x2.astype(jnp.float32))
    assert jnp.allclose(m2, ref2, atol=1e-5, rtol=1e-5), (m2, ref2)

    # case 3: odd tile count (2-way split with clamped duplicate tile skipped)
    #         plus a ragged last tile exercising the gated row mask
    x3 = jax.random.normal(jax.random.PRNGKey(2), (40, 128), dtype=jnp.float32)
    _, m3 = show_layer_output_statics2(x3, tile_rows=16)
    m3 = jax.block_until_ready(m3)
    ref3 = jnp.mean(x3.astype(jnp.float32))
    assert jnp.allclose(m3, ref3, atol=1e-5, rtol=1e-5), (m3, ref3)

    print("KERNEL_OK")
</pallas_src>

<mosaic_0001>
module attributes {stable_mosaic.version = 11 : i64} {
  func.func @kernel(%arg0: i32, %arg1: i32, %arg2: memref<16x128xf32, #tpu.memory_space<vmem>>, %arg3: memref<1x8x128xf32, #tpu.memory_space<vmem>>) attributes {dimension_semantics = [#tpu.dimension_semantics<parallel>, #tpu.dimension_semantics<arbitrary>], iteration_bounds = array<i64: 1, 1>, scalar_prefetch = 0 : i64, scratch_operands = 0 : i64, tpu.core_type = #tpu.core_type<tc>, window_params = [{transform_indices = @transform_0, window_bounds = array<i64: 16, 128>}, {transform_indices = @transform_1, window_bounds = array<i64: 1, 8, 128>}]} {
    %c0_i32 = arith.constant 0 : i32
    %0 = arith.cmpi eq, %arg1, %c0_i32 : i32
    %1 = arith.extui %0 : i1 to i32
    %c0_i32_0 = arith.constant 0 : i32
    %2 = arith.cmpi ne, %1, %c0_i32_0 : i32
    scf.if %2 {
      %cst_8 = arith.constant 0.000000e+00 : f32
      %12 = vector.broadcast %cst_8 : f32 to vector<8x128xf32>
      %c0_9 = arith.constant 0 : index
      %c0_10 = arith.constant 0 : index
      %c0_11 = arith.constant 0 : index
      %13 = vector.load %arg3[%c0_9, %c0_10, %c0_11] : memref<1x8x128xf32, #tpu.memory_space<vmem>>, vector<1x8x128xf32>
      %14 = vector.shape_cast %13 : vector<1x8x128xf32> to vector<8x128xf32>
      %15 = vector.shape_cast %12 : vector<8x128xf32> to vector<1x8x128xf32>
      tpu.vector_store %arg3[%c0_9, %c0_10, %c0_11], %15 {strides = array<i32>} : memref<1x8x128xf32, #tpu.memory_space<vmem>>, vector<1x8x128xf32>,
    } else {
    }
    %c0 = arith.constant 0 : index
    %c0_1 = arith.constant 0 : index
    %3 = vector.load %arg2[%c0, %c0_1] : memref<16x128xf32, #tpu.memory_space<vmem>>, vector<16x128xf32>
    %c0_2 = arith.constant 0 : index
    %c0_3 = arith.constant 0 : index
    %c0_4 = arith.constant 0 : index
    %4 = vector.load %arg3[%c0_2, %c0_3, %c0_4] : memref<1x8x128xf32, #tpu.memory_space<vmem>>, vector<1x8x128xf32>
    %5 = vector.shape_cast %4 : vector<1x8x128xf32> to vector<8x128xf32>
    %6 = vector.shape_cast %3 : vector<16x128xf32> to vector<2x8x128xf32>
    %cst = arith.constant dense<0.000000e+00> : vector<8x128xf32>
    %7 = vector.multi_reduction <add>, %6, %cst [0] : vector<2x8x128xf32> to vector<8x128xf32>
    %8 = arith.addf %5, %7 : vector<8x128xf32>
    %c0_5 = arith.constant 0 : index
    %c0_6 = arith.constant 0 : index
    %c0_7 = arith.constant 0 : index
    %9 = vector.load %arg3[%c0_5, %c0_6, %c0_7] : memref<1x8x128xf32, #tpu.memory_space<vmem>>, vector<1x8x128xf32>
    %10 = vector.shape_cast %9 : vector<1x8x128xf32> to vector<8x128xf32>
    %11 = vector.shape_cast %8 : vector<8x128xf32> to vector<1x8x128xf32>
    tpu.vector_store %arg3[%c0_5, %c0_6, %c0_7], %11 {strides = array<i32>} : memref<1x8x128xf32, #tpu.memory_space<vmem>>, vector<1x8x128xf32>,
    return
  }
  func.func @transform_0(%arg0: i32, %arg1: i32) -> (i32, i32) {
    %c1_i32 = arith.constant 1 : i32
    %0 = arith.muli %arg0, %c1_i32 : i32
    %1 = arith.addi %0, %arg1 : i32
    %c0_i32 = arith.constant 0 : i32
    %c0_i32_0 = arith.constant 0 : i32
    return %1, %c0_i32 : i32, i32
  }
  func.func @transform_1(%arg0: i32, %arg1: i32) -> (i32, i32, i32) {
    %c0_i32 = arith.constant 0 : i32
    %c0_i32_0 = arith.constant 0 : i32
    %c0_i32_1 = arith.constant 0 : i32
    return %arg0, %c0_i32, %c0_i32_0 : i32, i32, i32
  }
}

</mosaic_0001>

<llo_original>
// kernel: tpu_custom_call.1
$region0: #{tpu_custom_call.1}
  #allocation0 [shape = 'u32[]', space=smem, size = 0x4, offset = 0x4, fixed_abs, tag = 'smem constant byte address 0x4 - core index']
  #allocation1 [shape = 'u32[144,128]{1,0:T(1,128)}', space=vmem, size = 0x12000, scoped, tag = 'internal scratch']
  %s0 = inlined_call_operand.hbm [shape: f32[16,128], index: 0, kind: input, shape index: {}]
  %s1 = inlined_call_operand.hbm [shape: f32[1,8,128], index: 1, kind: output, shape index: {}]
  %s2 = sld [smem:[#allocation0]]
  $region22: #{tpu_custom_call.1} parent=0
    _
  %s4 = ssub.s32 1, %s2
  %s5 = scalar_select 0, %s4, %s2
  $region1: #{tpu_custom_call.1} parent=0
    #allocation2 [shape = 'u8[8192]{0}', space=vmem, size = 0x2000, scoped, tag = 'input window, operand 0, single buffered']
    #allocation3 [shape = 's32[1]{0}', space=sflag, size = 0x4, scoped, tag = 'scoped memory for tpu_custom_call.1']
    #allocation4 [shape = 's32[1]{0}', space=sflag, size = 0x4, scoped, tag = 'scoped memory for tpu_custom_call.1']
    #allocation5 [shape = 'u8[4096]{0}', space=vmem, size = 0x1000, scoped, tag = 'output window, operand 0, single buffered']
    %6 = vsyncpa [#allocation3], 0
    %7 = vsyncpa [#allocation4], 0
    // Predicated region
    $region2: #{tpu_custom_call.1} parent=1 // pred_check
      _
    $region3: #{tpu_custom_call.1} parent=1 // pred_check_branch
      %9 = sbr.rel (0) target = $region5
    $region4: #{tpu_custom_call.1} parent=1 // pred_region
      %s10 = sadd.s32 0, 0
      %s11 = smul.u32 2, %s10
      %s13 = ssub.s32 256, 256
      %14 = vsyncadd [#allocation3], %s13
      %s15 = smul.addr %s11, 128
      %s16 = scalar_lea.hbm %s0, %s15
      %s17 = sshll.u32 [#allocation2], 4
      %s18 = int_to_ptr.vmem [resolvable:$true] %s17
      %23 = dma.hbm_to_vmem [thread:$0]  %s16, 256, %s18, [#allocation3], 128, 128, 8
    $region5: #{tpu_custom_call.1} parent=1 // pred_fallthru
      _
    // Predicated region
    $region6: #{tpu_custom_call.1} parent=1 // pred_check
      _
    $region7: #{tpu_custom_call.1} parent=1 // pred_check_branch
      %25 = sbr.rel (0) target = $region9
    $region8: #{tpu_custom_call.1} parent=1 // pred_region
      %26 = dma.done [#allocation3], 256
    $region9: #{tpu_custom_call.1} parent=1 // pred_fallthru
      _
    %s27 = sadd.s32 0, 0
    %s28 = smul.u32 2, %s27
    %p29 = scmp.eq.s32.totalorder 0, 0
    // Predicated region
    $region10: #{tpu_custom_call.1} parent=1 // pred_check
      %p30 = pneg %p29
    $region11: #{tpu_custom_call.1} parent=1 // pred_check_branch
      %32 = sbr.rel (%p30) target = $region13
    $region12: #{tpu_custom_call.1} parent=1 // pred_region
      %33 = vst [vmem:[#allocation5] sm:$0xff] 0.0
    $region13: #{tpu_custom_call.1} parent=1 // pred_fallthru
      _
    %v34 = vld [vmem:[#allocation2] sm:$0xff]
    %v35 = vld [vmem:[#allocation2 + $0x8] sm:$0xff]
    %v36 = vld [vmem:[#allocation5] sm:$0xff]
    %v37 = vadd.f32 %v34, %v35
    %v38 = vadd.f32 %v36, %v37
    %39 = vst [vmem:[#allocation5] sm:$0xff] %v38
    // Predicated region
    $region14: #{tpu_custom_call.1} parent=1 // pred_check
      _
    $region15: #{tpu_custom_call.1} parent=1 // pred_check_branch
      %41 = sbr.rel (0) target = $region17
    $region16: #{tpu_custom_call.1} parent=1 // pred_region
      %s43 = ssub.s32 128, 128
      %44 = vsyncadd [#allocation4], %s43
      %s46 = sshll.u32 [#allocation5], 4
      %s47 = int_to_ptr.vmem [resolvable:$true] %s46
      %49 = dma.vmem_to_hbm [thread:$0]  %s47, 128, %s1, [#allocation4]
    $region17: #{tpu_custom_call.1} parent=1 // pred_fallthru
      _
    // Predicated region
    $region18: #{tpu_custom_call.1} parent=1 // pred_check
      _
    $region19: #{tpu_custom_call.1} parent=1 // pred_check_branch
      %51 = sbr.rel (0) target = $region21
    $region20: #{tpu_custom_call.1} parent=1 // pred_region
      %52 = dma.done [#allocation4], 128
    $region21: #{tpu_custom_call.1} parent=1 // pred_fallthru
      _
    %53 = vsyncpa [#allocation3], 1
    %54 = vsyncpa [#allocation4], 1

</llo_original>
